<compile_context>
chip_gen: v6e
topology: v6e:2x2x1
jax: 0.10.0
libtpu: 0.0.40
codegen_flags: <defaults>
</compile_context>

<pallas_src>
import jax
import jax.numpy as jnp
from jax.experimental import pallas as pl
from jax.experimental.pallas import tpu as pltpu

N_STATES = 57
N_HIDDEN = 50
N_ACTIONS = 20

# TPU-friendly padded sizes.
K_PAD = 64    # 57 -> 64   (sublane multiple of 8)
H_PAD = 64    # 50 -> 64   (clean lanes/sublanes for both matmuls)
O_PAD = 128   # 20 -> 128  (lane-dense output store)


def _round_up(n, m):
    return ((n + m - 1) // m) * m


def _net_kernel(x_ref, w1_ref, b1_ref, w2_ref, b2_ref, out_ref):
    # fc1: (TB, 64) bf16 @ (64, 64) bf16 -> f32
    h = jnp.dot(x_ref[...], w1_ref[...], preferred_element_type=jnp.float32)
    h = h + b1_ref[...]                       # bias in f32
    # F.leaky_relu default negative_slope = 0.01
    h = jnp.where(h > 0.0, h, 0.01 * h)
    # out: (TB, 64) bf16 @ (64, 128) bf16 -> f32 (zero-padded cols beyond 20)
    y = jnp.dot(h.astype(w2_ref.dtype), w2_ref[...],
                preferred_element_type=jnp.float32)
    out_ref[...] = (y + b2_ref[...]).astype(out_ref.dtype)


def net_forward(x, w1, b1, w2, b2, *, block_b=1024):
    """x: (B, 57) f32. Weights stored transposed vs PyTorch:
    w1 (57, 50), b1 (1, 50), w2 (50, 20), b2 (1, 20). Returns (B, 20) f32."""
    B = x.shape[0]

    # Batch tile: multiple of 8, capped at block_b, no larger than padded batch.
    tb = min(_round_up(block_b, 8), _round_up(B, 8))
    B_pad = _round_up(B, tb)
    grid = (B_pad // tb,)

    # Host-side padding + bf16 casts (cheap XLA ops outside the kernel).
    xp = jnp.zeros((B_pad, K_PAD), jnp.bfloat16)
    xp = xp.at[:B, :N_STATES].set(x.astype(jnp.bfloat16))
    w1p = jnp.zeros((K_PAD, H_PAD), jnp.bfloat16)
    w1p = w1p.at[:N_STATES, :N_HIDDEN].set(w1.astype(jnp.bfloat16))
    b1p = jnp.zeros((1, H_PAD), jnp.float32).at[:, :N_HIDDEN].set(b1)
    w2p = jnp.zeros((H_PAD, O_PAD), jnp.bfloat16)
    w2p = w2p.at[:N_HIDDEN, :N_ACTIONS].set(w2.astype(jnp.bfloat16))
    b2p = jnp.zeros((1, O_PAD), jnp.float32).at[:, :N_ACTIONS].set(b2)

    flops = 2 * B_pad * (K_PAD * H_PAD + H_PAD * O_PAD)
    bytes_accessed = (B_pad * K_PAD * 2            # x (bf16) in
                      + B_pad * O_PAD * 4          # padded output (f32) out
                      + (K_PAD * H_PAD + H_PAD * O_PAD) * 2   # weights (bf16)
                      + (H_PAD + O_PAD) * 4)       # biases (f32)

    out = pl.pallas_call(
        _net_kernel,
        out_shape=jax.ShapeDtypeStruct((B_pad, O_PAD), jnp.float32),
        grid=grid,
        in_specs=[
            pl.BlockSpec((tb, K_PAD), lambda i: (i, 0)),      # x: tiled over batch
            pl.BlockSpec((K_PAD, H_PAD), lambda i: (0, 0)),   # w1: resident
            pl.BlockSpec((1, H_PAD), lambda i: (0, 0)),       # b1: resident
            pl.BlockSpec((H_PAD, O_PAD), lambda i: (0, 0)),   # w2: resident
            pl.BlockSpec((1, O_PAD), lambda i: (0, 0)),       # b2: resident
        ],
        out_specs=pl.BlockSpec((tb, O_PAD), lambda i: (i, 0)),
        compiler_params=pltpu.CompilerParams(
            dimension_semantics=("parallel",),
        ),
        cost_estimate=pl.CostEstimate(
            flops=flops, transcendentals=0, bytes_accessed=bytes_accessed),
    )(xp, w1p, b1p, w2p, b2p)

    # Slice away batch + lane padding outside the kernel.
    return out[:B, :N_ACTIONS]


def init_params(key):
    """Mirror the PyTorch module: weights ~ Normal(0, 0.1); biases keep
    nn.Linear's default Uniform(-1/sqrt(fan_in), 1/sqrt(fan_in)).
    Weights stored as (in_features, out_features) = PyTorch weight transposed."""
    k1, k2, k3, k4 = jax.random.split(key, 4)
    w1 = 0.1 * jax.random.normal(k1, (N_STATES, N_HIDDEN), dtype=jnp.float32)
    b1 = jax.random.uniform(
        k2, (1, N_HIDDEN), dtype=jnp.float32,
        minval=-1.0 / jnp.sqrt(N_STATES), maxval=1.0 / jnp.sqrt(N_STATES))
    w2 = 0.1 * jax.random.normal(k3, (N_HIDDEN, N_ACTIONS), dtype=jnp.float32)
    b2 = jax.random.uniform(
        k4, (1, N_ACTIONS), dtype=jnp.float32,
        minval=-1.0 / jnp.sqrt(N_HIDDEN), maxval=1.0 / jnp.sqrt(N_HIDDEN))
    return w1, b1, w2, b2


def _reference(x, w1, b1, w2, b2):
    # Matches kernel numerics: bf16 inputs/weights, f32 accumulation + epilogue.
    xb = x.astype(jnp.bfloat16)
    h = jnp.dot(xb, w1.astype(jnp.bfloat16),
                preferred_element_type=jnp.float32) + b1
    h = jnp.where(h > 0.0, h, 0.01 * h)
    y = jnp.dot(h.astype(jnp.bfloat16), w2.astype(jnp.bfloat16),
                preferred_element_type=jnp.float32) + b2
    return y


if __name__ == "__main__":
    key = jax.random.PRNGKey(0)
    kx, kp = jax.random.split(key)

    w1, b1, w2, b2 = init_params(kp)

    # Small online-inference batch.
    B = 2
    x = jax.random.normal(kx, (B, N_STATES), dtype=jnp.float32)
    out = jax.block_until_ready(net_forward(x, w1, b1, w2, b2))
    ref = _reference(x, w1, b1, w2, b2)
    assert out.shape == (B, N_ACTIONS)
    assert jnp.allclose(out, ref, atol=1e-2, rtol=1e-2)

    # Exercise the multi-tile grid path (batch padding + resident weights).
    B2 = 24
    x2 = jax.random.normal(jax.random.PRNGKey(1), (B2, N_STATES), dtype=jnp.float32)
    out2 = jax.block_until_ready(net_forward(x2, w1, b1, w2, b2, block_b=8))
    ref2 = _reference(x2, w1, b1, w2, b2)
    assert out2.shape == (B2, N_ACTIONS)
    assert jnp.allclose(out2, ref2, atol=1e-2, rtol=1e-2)

    print("KERNEL_OK")
</pallas_src>

<mosaic_0001>
module attributes {stable_mosaic.version = 11 : i64} {
  func.func @_net_kernel(%arg0: i32, %arg1: memref<8x64xbf16, #tpu.memory_space<vmem>>, %arg2: memref<64x64xbf16, #tpu.memory_space<vmem>>, %arg3: memref<1x64xf32, #tpu.memory_space<vmem>>, %arg4: memref<64x128xbf16, #tpu.memory_space<vmem>>, %arg5: memref<1x128xf32, #tpu.memory_space<vmem>>, %arg6: memref<8x128xf32, #tpu.memory_space<vmem>>) attributes {dimension_semantics = [#tpu.dimension_semantics<parallel>], iteration_bounds = array<i64: 1>, scalar_prefetch = 0 : i64, scratch_operands = 0 : i64, tpu.core_type = #tpu.core_type<tc>, window_params = [{transform_indices = @transform_0, window_bounds = array<i64: 8, 64>}, {pipeline_mode = #tpu.pipeline_mode<synchronous>, transform_indices = @transform_1, window_bounds = array<i64: 64, 64>}, {pipeline_mode = #tpu.pipeline_mode<synchronous>, transform_indices = @transform_2, window_bounds = array<i64: 1, 64>}, {pipeline_mode = #tpu.pipeline_mode<synchronous>, transform_indices = @transform_3, window_bounds = array<i64: 64, 128>}, {pipeline_mode = #tpu.pipeline_mode<synchronous>, transform_indices = @transform_4, window_bounds = array<i64: 1, 128>}, {transform_indices = @transform_5, window_bounds = array<i64: 8, 128>}]} {
    %c0 = arith.constant 0 : index
    %c0_0 = arith.constant 0 : index
    %0 = vector.load %arg1[%c0, %c0_0] : memref<8x64xbf16, #tpu.memory_space<vmem>>, vector<8x64xbf16>
    %c0_1 = arith.constant 0 : index
    %c0_2 = arith.constant 0 : index
    %1 = vector.load %arg2[%c0_1, %c0_2] : memref<64x64xbf16, #tpu.memory_space<vmem>>, vector<64x64xbf16>
    %cst = arith.constant dense<0.000000e+00> : vector<8x64xf32>
    %2 = tpu.matmul %0, %1, %cst {dimension_numbers = #tpu.dot_dimension_numbers<[1], [0], [0], [1], [0, 0, 1, 1], [], []>} : vector<8x64xbf16>, vector<64x64xbf16>, vector<8x64xf32> -> vector<8x64xf32>
    %c0_3 = arith.constant 0 : index
    %c0_4 = arith.constant 0 : index
    %3 = vector.load %arg3[%c0_3, %c0_4] : memref<1x64xf32, #tpu.memory_space<vmem>>, vector<1x64xf32>
    %4 = vector.broadcast %3 : vector<1x64xf32> to vector<8x64xf32>
    %5 = arith.addf %2, %4 : vector<8x64xf32>
    %cst_5 = arith.constant 0.000000e+00 : f32
    %6 = vector.broadcast %cst_5 : f32 to vector<8x64xf32>
    %7 = arith.cmpf ogt, %5, %6 : vector<8x64xf32>
    %cst_6 = arith.constant 0.00999999977 : f32
    %8 = vector.broadcast %cst_6 : f32 to vector<8x64xf32>
    %9 = arith.mulf %8, %5 : vector<8x64xf32>
    %10 = arith.select %7, %5, %9 : vector<8x64xi1>, vector<8x64xf32>
    %11 = arith.truncf %10 : vector<8x64xf32> to vector<8x64xbf16>
    %c0_7 = arith.constant 0 : index
    %c0_8 = arith.constant 0 : index
    %12 = vector.load %arg4[%c0_7, %c0_8] : memref<64x128xbf16, #tpu.memory_space<vmem>>, vector<64x128xbf16>
    %cst_9 = arith.constant dense<0.000000e+00> : vector<8x128xf32>
    %13 = tpu.matmul %11, %12, %cst_9 {dimension_numbers = #tpu.dot_dimension_numbers<[1], [0], [0], [1], [0, 0, 1, 1], [], []>} : vector<8x64xbf16>, vector<64x128xbf16>, vector<8x128xf32> -> vector<8x128xf32>
    %c0_10 = arith.constant 0 : index
    %c0_11 = arith.constant 0 : index
    %14 = vector.load %arg5[%c0_10, %c0_11] : memref<1x128xf32, #tpu.memory_space<vmem>>, vector<1x128xf32>
    %15 = vector.broadcast %14 : vector<1x128xf32> to vector<8x128xf32>
    %16 = arith.addf %13, %15 : vector<8x128xf32>
    %c0_12 = arith.constant 0 : index
    %c0_13 = arith.constant 0 : index
    %17 = vector.load %arg6[%c0_12, %c0_13] : memref<8x128xf32, #tpu.memory_space<vmem>>, vector<8x128xf32>
    tpu.vector_store %arg6[%c0_12, %c0_13], %16 {strides = array<i32>} : memref<8x128xf32, #tpu.memory_space<vmem>>, vector<8x128xf32>,
    return
  }
  func.func @transform_0(%arg0: i32) -> (i32, i32) {
    %c0_i32 = arith.constant 0 : i32
    %c0_i32_0 = arith.constant 0 : i32
    return %arg0, %c0_i32 : i32, i32
  }
  func.func @transform_1(%arg0: i32) -> (i32, i32) {
    %c0_i32 = arith.constant 0 : i32
    %c0_i32_0 = arith.constant 0 : i32
    %c0_i32_1 = arith.constant 0 : i32
    return %c0_i32, %c0_i32_0 : i32, i32
  }
  func.func @transform_2(%arg0: i32) -> (i32, i32) {
    %c0_i32 = arith.constant 0 : i32
    %c0_i32_0 = arith.constant 0 : i32
    %c0_i32_1 = arith.constant 0 : i32
    return %c0_i32, %c0_i32_0 : i32, i32
  }
  func.func @transform_3(%arg0: i32) -> (i32, i32) {
    %c0_i32 = arith.constant 0 : i32
    %c0_i32_0 = arith.constant 0 : i32
    %c0_i32_1 = arith.constant 0 : i32
    return %c0_i32, %c0_i32_0 : i32, i32
  }
  func.func @transform_4(%arg0: i32) -> (i32, i32) {
    %c0_i32 = arith.constant 0 : i32
    %c0_i32_0 = arith.constant 0 : i32
    %c0_i32_1 = arith.constant 0 : i32
    return %c0_i32, %c0_i32_0 : i32, i32
  }
  func.func @transform_5(%arg0: i32) -> (i32, i32) {
    %c0_i32 = arith.constant 0 : i32
    %c0_i32_0 = arith.constant 0 : i32
    return %arg0, %c0_i32 : i32, i32
  }
}

</mosaic_0001>

<llo_original>
// kernel: tpu_custom_call.1
$region0: #{tpu_custom_call.1}
  #allocation0 [shape = 'u32[]', space=smem, size = 0x4, offset = 0x4, fixed_abs, tag = 'smem constant byte address 0x4 - core index']
  #allocation1 [shape = 'u32[144,128]{1,0:T(1,128)}', space=vmem, size = 0x12000, scoped, tag = 'internal scratch']
  %s0 = inlined_call_operand.hbm [shape: bf16[8,64], index: 0, kind: input, shape index: {}]
  %s1 = inlined_call_operand.hbm [shape: bf16[64,64], index: 1, kind: input, shape index: {}]
  %s2 = inlined_call_operand.vmem [shape: f32[1,64], index: 2, kind: input, shape index: {}]
  %s3 = inlined_call_operand.hbm [shape: bf16[64,128], index: 3, kind: input, shape index: {}]
  %s4 = inlined_call_operand.vmem [shape: f32[1,128], index: 4, kind: input, shape index: {}]
  %s5 = inlined_call_operand.hbm [shape: f32[8,128], index: 5, kind: output, shape index: {}]
  %s6 = sld [smem:[#allocation0]]
  $region42: #{tpu_custom_call.1} parent=0
    _
  %s8 = ssub.s32 1, %s6
  %s9 = scalar_select 0, %s8, %s6
  $region1: #{tpu_custom_call.1} parent=0
    #allocation2 [shape = 'u8[2048]{0}', space=vmem, size = 0x800, scoped, tag = 'input window, operand 0, single buffered']
    #allocation3 [shape = 's32[1]{0}', space=sflag, size = 0x4, scoped, tag = 'scoped memory for tpu_custom_call.1']
    #allocation4 [shape = 's32[1]{0}', space=sflag, size = 0x4, scoped, tag = 'scoped memory for tpu_custom_call.1']
    #allocation5 [shape = 'u8[16384]{0}', space=vmem, size = 0x4000, scoped, tag = 'input window, operand 1, single buffered']
    #allocation6 [shape = 's32[1]{0}', space=sflag, size = 0x4, scoped, tag = 'scoped memory for tpu_custom_call.1']
    #allocation7 [shape = 'u8[16384]{0}', space=vmem, size = 0x4000, scoped, tag = 'input window, operand 3, single buffered']
    #allocation8 [shape = 'u8[4096]{0}', space=vmem, size = 0x1000, scoped, tag = 'output window, operand 0, single buffered']
    %10 = vsyncpa [#allocation3], 0
    %11 = vsyncpa [#allocation6], 0
    %12 = vsyncpa [#allocation4], 0
    // Predicated region
    $region2: #{tpu_custom_call.1} parent=1 // pred_check
      _
    $region3: #{tpu_custom_call.1} parent=1 // pred_check_branch
      %14 = sbr.rel (0) target = $region5
    $region4: #{tpu_custom_call.1} parent=1 // pred_region
      %s16 = ssub.s32 64, 64
      %17 = vsyncadd [#allocation3], %s16
      %s19 = sshll.u32 [#allocation2], 4
      %s20 = int_to_ptr.vmem [resolvable:$true] %s19
      %22 = dma.hbm_to_vmem [thread:$0]  %s0, 64, %s20, [#allocation3]
    $region5: #{tpu_custom_call.1} parent=1 // pred_fallthru
      _
    // Predicated region
    $region6: #{tpu_custom_call.1} parent=1 // pred_check
      _
    $region7: #{tpu_custom_call.1} parent=1 // pred_check_branch
      %24 = sbr.rel (0) target = $region9
    $region8: #{tpu_custom_call.1} parent=1 // pred_region
      %s26 = ssub.s32 512, 512
      %27 = vsyncadd [#allocation6], %s26
      %s28 = sshll.u32 [#allocation5], 4
      %s29 = int_to_ptr.vmem [resolvable:$true] %s28
      %34 = dma.hbm_to_vmem [thread:$0]  %s1, 512, %s29, [#allocation6], 64, 64, 4
    $region9: #{tpu_custom_call.1} parent=1 // pred_fallthru
      _
    // Predicated region
    $region10: #{tpu_custom_call.1} parent=1 // pred_check
      _
    $region11: #{tpu_custom_call.1} parent=1 // pred_check_branch
      %36 = sbr.rel (0) target = $region13
    $region12: #{tpu_custom_call.1} parent=1 // pred_region
      _
    $region13: #{tpu_custom_call.1} parent=1 // pred_fallthru
      _
    // Predicated region
    $region14: #{tpu_custom_call.1} parent=1 // pred_check
      _
    $region15: #{tpu_custom_call.1} parent=1 // pred_check_branch
      %38 = sbr.rel (0) target = $region17
    $region16: #{tpu_custom_call.1} parent=1 // pred_region
      %s40 = ssub.s32 512, 512
      %41 = vsyncadd [#allocation6], %s40
      %s42 = sshll.u32 [#allocation7], 4
      %s43 = int_to_ptr.vmem [resolvable:$true] %s42
      %48 = dma.hbm_to_vmem [thread:$0]  %s3, 512, %s43, [#allocation6], 64, 64, 4
    $region17: #{tpu_custom_call.1} parent=1 // pred_fallthru
      _
    // Predicated region
    $region18: #{tpu_custom_call.1} parent=1 // pred_check
      _
    $region19: #{tpu_custom_call.1} parent=1 // pred_check_branch
      %50 = sbr.rel (0) target = $region21
    $region20: #{tpu_custom_call.1} parent=1 // pred_region
      _
    $region21: #{tpu_custom_call.1} parent=1 // pred_fallthru
      _
    // Predicated region
    $region22: #{tpu_custom_call.1} parent=1 // pred_check
      _
    $region23: #{tpu_custom_call.1} parent=1 // pred_check_branch
      %52 = sbr.rel (0) target = $region25
    $region24: #{tpu_custom_call.1} parent=1 // pred_region
      %53 = dma.done [#allocation3], 64
    $region25: #{tpu_custom_call.1} parent=1 // pred_fallthru
      _
    // Predicated region
    $region26: #{tpu_custom_call.1} parent=1 // pred_check
      _
    $region27: #{tpu_custom_call.1} parent=1 // pred_check_branch
      %55 = sbr.rel (0) target = $region29
    $region28: #{tpu_custom_call.1} parent=1 // pred_region
      %56 = dma.done [#allocation6], 512
    $region29: #{tpu_custom_call.1} parent=1 // pred_fallthru
      _
    // Predicated region
    $region30: #{tpu_custom_call.1} parent=1 // pred_check
      _
    $region31: #{tpu_custom_call.1} parent=1 // pred_check_branch
      %58 = sbr.rel (0) target = $region33
    $region32: #{tpu_custom_call.1} parent=1 // pred_region
      %59 = dma.done [#allocation6], 512
    $region33: #{tpu_custom_call.1} parent=1 // pred_fallthru
      _
    %v61 = vld [vmem:[#allocation2] sm:$0xf]
    %v62 = vld [vmem:[#allocation5] sm:$0xf]
    %v63 = vld [vmem:[#allocation5 + $0x4] sm:$0xf]
    %v64 = vld [vmem:[#allocation5 + $0x8] sm:$0xf]
    %v65 = vld [vmem:[#allocation5 + $0xc] sm:$0xf]
    %v66 = vld [vmem:[#allocation5 + $0x10] sm:$0xf]
    %v67 = vld [vmem:[#allocation5 + $0x14] sm:$0xf]
    %v68 = vld [vmem:[#allocation5 + $0x18] sm:$0xf]
    %v69 = vld [vmem:[#allocation5 + $0x1c] sm:$0xf]
    %v70 = vld [vmem:[%s2] sm:$0x1]
    %v72 = vlaneseq
    %v73 = vshrl.u32 %v72, 7
    %v74 = vsub.s32 0, %v73
    %v75 = vrot.slane %v70, %v74
    %v85 = vunpack.c.l.b16 %v62
    %v86 = vunpack.c.l.b16 %v63
    %v87 = vunpack.c.l.b16 %v64
    %v88 = vunpack.c.l.b16 %v65
    %v89 = vunpack.c.l.b16 %v66
    %v90 = vunpack.c.l.b16 %v67
    %v91 = vunpack.c.l.b16 %v68
    %v92 = vunpack.c.l.b16 %v69
    %v93 = vpack.c.b16 %v86, %v85
    %v94 = vpack.c.b16 %v88, %v87
    %v95 = vpack.c.b16 %v90, %v89
    %v96 = vpack.c.b16 %v92, %v91
    %vm101 = vcmask 523264
    %v103 = vsel %vm101, %v61, 0
    %105 = vmatprep.subr.bf16.mxu0 0
    %106 = vmatpush1.bf16.msra.mxu0 0
    %107 = vmatprep.subr.bf16.mxu0 0
    %108 = vmatpush1.bf16.msra.mxu0 0
    %109 = vmatprep.subr.bf16.mxu0 0
    %110 = vmatpush1.bf16.msra.mxu0 0
    %111 = vmatprep.subr.bf16.mxu0 0
    %112 = vmatpush1.bf16.msra.mxu0 0
    %113 = vmatprep.subr.bf16.mxu0 0
    %114 = vmatpush1.bf16.msra.mxu0 %v96
    %115 = vmatprep.subr.bf16.mxu0 0
    %116 = vmatpush1.bf16.msra.mxu0 %v95
    %117 = vmatprep.subr.bf16.mxu0 0
    %118 = vmatpush1.bf16.msra.mxu0 %v94
    %119 = vmatprep.subr.bf16.mxu0 0
    %120 = vmatpush1.bf16.msra.mxu0 %v93
    %121 = vmatprep.subr.bf16.mxu0 0
    %122 = vmatpush2.bf16.msra.mxu0 0
    %123 = vmatprep.subr.bf16.mxu0 0
    %124 = vmatpush2.bf16.msra.mxu0 0
    %125 = vmatprep.subr.bf16.mxu0 0
    %126 = vmatpush2.bf16.msra.mxu0 0
    %127 = vmatprep.subr.bf16.mxu0 0
    %128 = vmatpush2.bf16.msra.mxu0 0
    %129 = vmatprep.subr.bf16.mxu0 0
    %130 = vmatpush2.bf16.msra.mxu0 0
    %131 = vmatprep.subr.bf16.mxu0 0
    %132 = vmatpush2.bf16.msra.mxu0 0
    %133 = vmatprep.subr.bf16.mxu0 0
    %134 = vmatpush2.bf16.msra.mxu0 0
    %135 = vmatprep.subr.bf16.mxu0 0
    %136 = vmatpush2.bf16.msra.mxu0 0
    %137 = vmatprep.mubr.bf16.mxu0 0
    %138 = vmatmul.mubr.bf16.gmra.mxu0 %v103
    %v139 = vpop.f32.mrf.mxu0
    %v140 = vadd.f32 %v75, %v139
    %v141 = vpop.f32.mrf.mxu0
    %v142 = vpop.f32.mrf.mxu0
    %v143 = vpop.f32.mrf.mxu0
    %144 = vdwg.mxu0
    %vm145 = vcmp.gt.f32.partialorder %v140, 0.0
    %v146 = vmul.f32 %v140, 0.01
    %v147 = vsel %vm145, %v140, %v146
    %v148 = vpack.c.bf16 %v147, %v147
    %v149 = vld [vmem:[#allocation7] sm:$0xf]
    %v150 = vld [vmem:[#allocation7 + $0x4] sm:$0xf]
    %v151 = vld [vmem:[#allocation7 + $0x8] sm:$0xf]
    %v152 = vld [vmem:[#allocation7 + $0xc] sm:$0xf]
    %v153 = vld [vmem:[#allocation7 + $0x10] sm:$0xf]
    %v154 = vld [vmem:[#allocation7 + $0x14] sm:$0xf]
    %v155 = vld [vmem:[#allocation7 + $0x18] sm:$0xf]
    %v156 = vld [vmem:[#allocation7 + $0x1c] sm:$0xf]
    %v157 = vld [vmem:[%s4] sm:$0x1]
    %v159 = vlaneseq
    %v160 = vshrl.u32 %v159, 7
    %v161 = vsub.s32 0, %v160
    %v162 = vrot.slane %v157, %v161
    %v172 = vunpack.c.l.b16 %v149
    %v173 = vunpack.c.l.b16 %v150
    %v174 = vunpack.c.l.b16 %v151
    %v175 = vunpack.c.l.b16 %v152
    %v176 = vunpack.c.l.b16 %v153
    %v177 = vunpack.c.l.b16 %v154
    %v178 = vunpack.c.l.b16 %v155
    %v179 = vunpack.c.l.b16 %v156
    %v180 = vpack.c.b16 %v173, %v172
    %v181 = vpack.c.b16 %v175, %v174
    %v182 = vpack.c.b16 %v177, %v176
    %v183 = vpack.c.b16 %v179, %v178
    %v189 = vsel %vm101, %v148, 0
    %191 = vmatprep.subr.bf16.mxu0 0
    %192 = vmatpush1.bf16.msra.mxu0 0
    %193 = vmatprep.subr.bf16.mxu0 0
    %194 = vmatpush1.bf16.msra.mxu0 0
    %195 = vmatprep.subr.bf16.mxu0 0
    %196 = vmatpush1.bf16.msra.mxu0 0
    %197 = vmatprep.subr.bf16.mxu0 0
    %198 = vmatpush1.bf16.msra.mxu0 0
    %199 = vmatprep.subr.bf16.mxu0 0
    %200 = vmatpush1.bf16.msra.mxu0 %v183
    %201 = vmatprep.subr.bf16.mxu0 0
    %202 = vmatpush1.bf16.msra.mxu0 %v182
    %203 = vmatprep.subr.bf16.mxu0 0
    %204 = vmatpush1.bf16.msra.mxu0 %v181
    %205 = vmatprep.subr.bf16.mxu0 0
    %206 = vmatpush1.bf16.msra.mxu0 %v180
    %207 = vmatprep.subr.bf16.mxu0 0
    %208 = vmatpush2.bf16.msra.mxu0 0
    %209 = vmatprep.subr.bf16.mxu0 0
    %210 = vmatpush2.bf16.msra.mxu0 0
    %211 = vmatprep.subr.bf16.mxu0 0
    %212 = vmatpush2.bf16.msra.mxu0 0
    %213 = vmatprep.subr.bf16.mxu0 0
    %214 = vmatpush2.bf16.msra.mxu0 0
    %215 = vmatprep.subr.bf16.mxu0 0
    %216 = vmatpush2.bf16.msra.mxu0 0
    %217 = vmatprep.subr.bf16.mxu0 0
    %218 = vmatpush2.bf16.msra.mxu0 0
    %219 = vmatprep.subr.bf16.mxu0 0
    %220 = vmatpush2.bf16.msra.mxu0 0
    %221 = vmatprep.subr.bf16.mxu0 0
    %222 = vmatpush2.bf16.msra.mxu0 0
    %223 = vmatprep.mubr.bf16.mxu0 0
    %224 = vmatmul.mubr.bf16.gmra.mxu0 %v189
    %v225 = vpop.f32.mrf.mxu0
    %v226 = vadd.f32 %v162, %v225
    %v227 = vpop.f32.mrf.mxu0
    %v228 = vpop.f32.mrf.mxu0
    %v229 = vpop.f32.mrf.mxu0
    %230 = vdwg.mxu0
    %231 = vst [vmem:[#allocation8] sm:$0xff] %v226
    // Predicated region
    $region34: #{tpu_custom_call.1} parent=1 // pred_check
      _
    $region35: #{tpu_custom_call.1} parent=1 // pred_check_branch
      %233 = sbr.rel (0) target = $region37
    $region36: #{tpu_custom_call.1} parent=1 // pred_region
      %s235 = ssub.s32 128, 128
      %236 = vsyncadd [#allocation4], %s235
      %s238 = sshll.u32 [#allocation8], 4
      %s239 = int_to_ptr.vmem [resolvable:$true] %s238
      %241 = dma.vmem_to_hbm [thread:$0]  %s239, 128, %s5, [#allocation4]
    $region37: #{tpu_custom_call.1} parent=1 // pred_fallthru
      _
    // Predicated region
    $region38: #{tpu_custom_call.1} parent=1 // pred_check
      _
    $region39: #{tpu_custom_call.1} parent=1 // pred_check_branch
      %243 = sbr.rel (0) target = $region41
    $region40: #{tpu_custom_call.1} parent=1 // pred_region
      %244 = dma.done [#allocation4], 128
    $region41: #{tpu_custom_call.1} parent=1 // pred_fallthru
      _
    %245 = vsyncpa [#allocation3], 1
    %246 = vsyncpa [#allocation6], 1
    %247 = vsyncpa [#allocation4], 1

</llo_original>
